<compile_context>
chip_gen: v5e
topology: v5e:2x2
jax: 0.10.0
libtpu: 0.0.40
codegen_flags: <defaults>
</compile_context>

<pallas_src>
import functools

import jax
import jax.numpy as jnp
from jax.experimental import pallas as pl
from jax.experimental.pallas import tpu as pltpu


def _self_collision_kernel(scal_ref,                     # SMEM (2,): [w*(thr+b3), 0.5*w]
                           q_ref, w1_ref, b1_ref,        # VMEM tiles
                           w2_ref, b2_ref, w3_ref,
                           out_ref):
    thresh_w = scal_ref[0]          # weight * (distance_threshold + b3)
    hi_w = scal_ref[1]              # weight * 0.5

    q = q_ref[...]                                                      # (TN, D) f32

    # ---- layer 1: (TN, D) @ (D, H1) on the MXU, f32 (K = n_dof is tiny) ----
    h1 = jnp.maximum(
        jnp.dot(q, w1_ref[...], preferred_element_type=jnp.float32)
        + b1_ref[...], 0.0)                                             # (TN, H1)

    # ---- layer 2: dominant matmul, bf16 inputs / f32 accumulation ----------
    h1 = h1.astype(w2_ref.dtype)      # no-op on the pure-f32 path
    h2 = jnp.maximum(
        jnp.dot(h1, w2_ref[...], preferred_element_type=jnp.float32)
        + b2_ref[...], 0.0)                                             # (TN, H2)

    # ---- output layer (H2 -> 1) as a lane (XLU) reduction; w3 is already
    #      pre-scaled by `weight` host-side --------------------------------
    dist_w = jnp.sum(h2 * w3_ref[...], axis=1, keepdims=True)           # (TN, 1)

    # ---- fused epilogue:
    #      weight * clip(d + thresh, 0, 0.5) == clip(weight*d + weight*thresh,
    #                                               0, 0.5*weight)  (weight>=0)
    #      GaussianProjection with empty params is the identity.
    out_ref[...] = jnp.clip(dist_w + thresh_w, 0.0, hi_w)


def prepare_self_collision_params(w1, b1, w2, b2, w3, b3, weight,
                                  distance_threshold, use_bf16=True):
    """One-time (init-time) parameter layout / cast / constant folding.

    Keep this out of the per-call hot path (review: hoist weight prep)."""
    mm_dtype = jnp.bfloat16 if use_bf16 else jnp.float32
    weight = jnp.asarray(weight, jnp.float32)

    w1 = jnp.asarray(w1, jnp.float32)                              # (D,  H1)
    b1 = jnp.asarray(b1, jnp.float32).reshape(1, -1)               # (1,  H1)
    w2 = jnp.asarray(w2, mm_dtype)                                 # (H1, H2)
    b2 = jnp.asarray(b2, jnp.float32).reshape(1, -1)               # (1,  H2)
    # final layer weight pre-scaled by the cost weight (epilogue fold)
    w3 = (weight * jnp.asarray(w3, jnp.float32)).reshape(1, -1)    # (1,  H2)
    thresh_w = weight * (jnp.asarray(distance_threshold, jnp.float32)
                         + jnp.asarray(b3, jnp.float32))
    scal = jnp.stack([thresh_w, 0.5 * weight])                     # SMEM scalars
    return (scal, w1, b1, w2, b2, w3)


@functools.partial(jax.jit, static_argnames=("tile_n",))
def robot_self_collision_cost(q, params, tile_n=None):
    """q: (B, H, n_dof) float32, params from prepare_self_collision_params.
    Returns cost: (B, H) float32."""
    scal, w1, b1, w2, b2, w3 = params
    B, H, D = q.shape
    N = B * H
    H1 = w1.shape[1]
    H2 = w2.shape[1]

    if tile_n is None:
        # Overhead-bound kernel: single grid step for moderate N, 2048-row
        # tiles beyond that (>= 2 tiles so v7x's two TensorCores both work,
        # still only a handful of 0.35us grid steps on v5e/v6e).
        tile_n = N if N <= 2048 else 2048
    tile_n = min(tile_n, N)
    n_tiles = pl.cdiv(N, tile_n)     # ragged last tile handled by Pallas masking

    # Free reshape -- no pad, no transpose, no extra HBM pass over q.
    q2 = q.reshape(N, D).astype(jnp.float32)

    out = pl.pallas_call(
        _self_collision_kernel,
        out_shape=jax.ShapeDtypeStruct((N, 1), jnp.float32),
        grid=(n_tiles,),
        in_specs=[
            pl.BlockSpec(memory_space=pltpu.MemorySpace.SMEM),      # epilogue scalars
            pl.BlockSpec((tile_n, D), lambda i: (i, 0)),            # q tile (natural)
            # constant index_maps -> weights stay VMEM-resident across steps
            pl.BlockSpec((D, H1), lambda i: (0, 0)),                # W1
            pl.BlockSpec((1, H1), lambda i: (0, 0)),                # b1
            pl.BlockSpec((H1, H2), lambda i: (0, 0)),               # W2 (bf16 path)
            pl.BlockSpec((1, H2), lambda i: (0, 0)),                # b2
            pl.BlockSpec((1, H2), lambda i: (0, 0)),                # weight * w3
        ],
        out_specs=pl.BlockSpec((tile_n, 1), lambda i: (i, 0)),
        compiler_params=pltpu.CompilerParams(
            dimension_semantics=("parallel",)),
    )(scal, q2, w1, b1, w2, b2, w3)

    return out.reshape(B, H)


def _reference(q, w1, b1, w2, b2, w3, b3, weight, thresh):
    B, H, D = q.shape
    qf = q.reshape(B * H, D)
    h1 = jnp.maximum(qf @ w1 + b1.reshape(1, -1), 0.0)
    h2 = jnp.maximum(h1 @ w2 + b2.reshape(1, -1), 0.0)
    d = h2 @ w3.reshape(-1, 1) + b3
    res = jnp.clip(d[:, 0] + thresh, 0.0, 0.5)
    return (weight * res).reshape(B, H)


if __name__ == "__main__":
    B, H, n_dof = 2, 8, 7           # batch, horizon, joints (Franka-like)
    H1, H2 = 128, 128               # MLP hidden sizes

    key = jax.random.PRNGKey(0)
    kq, k1, k2, k3, k4, k5, k6, kq2 = jax.random.split(key, 8)

    q = jax.random.normal(kq, (B, H, n_dof), dtype=jnp.float32)

    # deterministic synthetic MLP parameters (self-collision distance net)
    w1 = jax.random.normal(k1, (n_dof, H1), dtype=jnp.float32) * 0.3
    b1 = jax.random.normal(k2, (H1,), dtype=jnp.float32) * 0.05
    w2 = jax.random.normal(k3, (H1, H2), dtype=jnp.float32) * 0.1
    b2 = jax.random.normal(k4, (H2,), dtype=jnp.float32) * 0.05
    w3 = jax.random.normal(k5, (1, H2), dtype=jnp.float32) * 0.1
    b3 = float(jax.random.normal(k6, ()) * 0.05)

    weight = 5.0
    distance_threshold = -0.01

    # ---- f32 path, single grid step -------------------------------------
    params_f32 = prepare_self_collision_params(
        w1, b1, w2, b2, w3, b3, weight, distance_threshold, use_bf16=False)
    cost = robot_self_collision_cost(q, params_f32)
    jax.block_until_ready(cost)
    ref = _reference(q, w1, b1, w2, b2, w3, b3, weight, distance_threshold)
    assert cost.shape == (B, H)
    assert jnp.allclose(cost, ref, atol=1e-4, rtol=1e-4)

    # ---- multi-tile grid + ragged final tile (N=360, tile_n=128 -> 3 tiles)
    B2, horizon2 = 4, 90
    q2 = jax.random.normal(kq2, (B2, horizon2, n_dof), dtype=jnp.float32)
    cost2 = robot_self_collision_cost(q2, params_f32, tile_n=128)
    ref2 = _reference(q2, w1, b1, w2, b2, w3, b3, weight, distance_threshold)
    assert cost2.shape == (B2, horizon2)
    assert jnp.allclose(cost2, ref2, atol=1e-4, rtol=1e-4)

    # ---- default bf16 matmul-input path (f32 accumulation) ---------------
    params_bf16 = prepare_self_collision_params(
        w1, b1, w2, b2, w3, b3, weight, distance_threshold, use_bf16=True)
    cost3 = robot_self_collision_cost(q2, params_bf16)
    jax.block_until_ready(cost3)
    assert jnp.allclose(cost3, ref2, atol=5e-2, rtol=5e-2)

    # TODO(synk): RobotSphereCollision URDF/geometry construction and the
    # self.distance() sphere-collision path are host-side setup / a separate
    # method, not part of forward(); not ported here.
    print("KERNEL_OK")
</pallas_src>

<mosaic_0001>
module attributes {stable_mosaic.version = 11 : i64} {
  func.func @_self_collision_kernel(%arg0: i32, %arg1: memref<2xf32, #tpu.memory_space<smem>>, %arg2: memref<16x7xf32, #tpu.memory_space<vmem>>, %arg3: memref<7x128xf32, #tpu.memory_space<vmem>>, %arg4: memref<1x128xf32, #tpu.memory_space<vmem>>, %arg5: memref<128x128xf32, #tpu.memory_space<vmem>>, %arg6: memref<1x128xf32, #tpu.memory_space<vmem>>, %arg7: memref<1x128xf32, #tpu.memory_space<vmem>>, %arg8: memref<16x1xf32, #tpu.memory_space<vmem>>) attributes {dimension_semantics = [#tpu.dimension_semantics<parallel>], iteration_bounds = array<i64: 1>, scalar_prefetch = 0 : i64, scratch_operands = 0 : i64, tpu.core_type = #tpu.core_type<tc>, window_params = [{transform_indices = @transform_0, window_bounds = array<i64: 2>}, {transform_indices = @transform_1, window_bounds = array<i64: 16, 7>}, {pipeline_mode = #tpu.pipeline_mode<synchronous>, transform_indices = @transform_2, window_bounds = array<i64: 7, 128>}, {pipeline_mode = #tpu.pipeline_mode<synchronous>, transform_indices = @transform_3, window_bounds = array<i64: 1, 128>}, {pipeline_mode = #tpu.pipeline_mode<synchronous>, transform_indices = @transform_4, window_bounds = array<i64: 128, 128>}, {pipeline_mode = #tpu.pipeline_mode<synchronous>, transform_indices = @transform_5, window_bounds = array<i64: 1, 128>}, {pipeline_mode = #tpu.pipeline_mode<synchronous>, transform_indices = @transform_6, window_bounds = array<i64: 1, 128>}, {transform_indices = @transform_7, window_bounds = array<i64: 16, 1>}]} {
    %c0 = arith.constant 0 : index
    %0 = memref.load %arg1[%c0] : memref<2xf32, #tpu.memory_space<smem>>
    %c1 = arith.constant 1 : index
    %1 = memref.load %arg1[%c1] : memref<2xf32, #tpu.memory_space<smem>>
    %c0_0 = arith.constant 0 : index
    %c0_1 = arith.constant 0 : index
    %2 = vector.load %arg2[%c0_0, %c0_1] : memref<16x7xf32, #tpu.memory_space<vmem>>, vector<16x7xf32>
    %c0_2 = arith.constant 0 : index
    %c0_3 = arith.constant 0 : index
    %3 = vector.load %arg3[%c0_2, %c0_3] : memref<7x128xf32, #tpu.memory_space<vmem>>, vector<7x128xf32>
    %cst = arith.constant dense<0.000000e+00> : vector<16x128xf32>
    %4 = tpu.matmul %2, %3, %cst {dimension_numbers = #tpu.dot_dimension_numbers<[1], [0], [0], [1], [0, 0, 1, 1], [], []>} : vector<16x7xf32>, vector<7x128xf32>, vector<16x128xf32> -> vector<16x128xf32>
    %c0_4 = arith.constant 0 : index
    %c0_5 = arith.constant 0 : index
    %5 = vector.load %arg4[%c0_4, %c0_5] : memref<1x128xf32, #tpu.memory_space<vmem>>, vector<1x128xf32>
    %6 = vector.broadcast %5 : vector<1x128xf32> to vector<16x128xf32>
    %7 = arith.addf %4, %6 : vector<16x128xf32>
    %cst_6 = arith.constant 0.000000e+00 : f32
    %8 = vector.broadcast %cst_6 : f32 to vector<16x128xf32>
    %9 = arith.maximumf %7, %8 : vector<16x128xf32>
    %c0_7 = arith.constant 0 : index
    %c0_8 = arith.constant 0 : index
    %10 = vector.load %arg5[%c0_7, %c0_8] : memref<128x128xf32, #tpu.memory_space<vmem>>, vector<128x128xf32>
    %cst_9 = arith.constant dense<0.000000e+00> : vector<16x128xf32>
    %11 = tpu.matmul %9, %10, %cst_9 {dimension_numbers = #tpu.dot_dimension_numbers<[1], [0], [0], [1], [0, 0, 1, 1], [], []>} : vector<16x128xf32>, vector<128x128xf32>, vector<16x128xf32> -> vector<16x128xf32>
    %c0_10 = arith.constant 0 : index
    %c0_11 = arith.constant 0 : index
    %12 = vector.load %arg6[%c0_10, %c0_11] : memref<1x128xf32, #tpu.memory_space<vmem>>, vector<1x128xf32>
    %13 = vector.broadcast %12 : vector<1x128xf32> to vector<16x128xf32>
    %14 = arith.addf %11, %13 : vector<16x128xf32>
    %cst_12 = arith.constant 0.000000e+00 : f32
    %15 = vector.broadcast %cst_12 : f32 to vector<16x128xf32>
    %16 = arith.maximumf %14, %15 : vector<16x128xf32>
    %c0_13 = arith.constant 0 : index
    %c0_14 = arith.constant 0 : index
    %17 = vector.load %arg7[%c0_13, %c0_14] : memref<1x128xf32, #tpu.memory_space<vmem>>, vector<1x128xf32>
    %18 = vector.broadcast %17 : vector<1x128xf32> to vector<16x128xf32>
    %19 = arith.mulf %16, %18 : vector<16x128xf32>
    %cst_15 = arith.constant dense<0.000000e+00> : vector<16xf32>
    %20 = vector.multi_reduction <add>, %19, %cst_15 [1] : vector<16x128xf32> to vector<16xf32>
    %21 = vector.shape_cast %20 : vector<16xf32> to vector<16x1xf32>
    %22 = vector.broadcast %0 : f32 to vector<16x1xf32>
    %23 = arith.addf %21, %22 : vector<16x1xf32>
    %cst_16 = arith.constant 0.000000e+00 : f32
    %24 = vector.broadcast %cst_16 : f32 to vector<16x1xf32>
    %25 = arith.maximumf %24, %23 : vector<16x1xf32>
    %26 = vector.broadcast %1 : f32 to vector<16x1xf32>
    %27 = arith.minimumf %26, %25 : vector<16x1xf32>
    %c0_17 = arith.constant 0 : index
    %c0_18 = arith.constant 0 : index
    %28 = vector.load %arg8[%c0_17, %c0_18] : memref<16x1xf32, #tpu.memory_space<vmem>>, vector<16x1xf32>
    tpu.vector_store %arg8[%c0_17, %c0_18], %27 {strides = array<i32>} : memref<16x1xf32, #tpu.memory_space<vmem>>, vector<16x1xf32>,
    return
  }
  func.func @transform_0(%arg0: i32) -> i32 {
    %c0_i32 = arith.constant 0 : i32
    %c0_i32_0 = arith.constant 0 : i32
    return %c0_i32 : i32
  }
  func.func @transform_1(%arg0: i32) -> (i32, i32) {
    %c0_i32 = arith.constant 0 : i32
    %c0_i32_0 = arith.constant 0 : i32
    return %arg0, %c0_i32 : i32, i32
  }
  func.func @transform_2(%arg0: i32) -> (i32, i32) {
    %c0_i32 = arith.constant 0 : i32
    %c0_i32_0 = arith.constant 0 : i32
    %c0_i32_1 = arith.constant 0 : i32
    return %c0_i32, %c0_i32_0 : i32, i32
  }
  func.func @transform_3(%arg0: i32) -> (i32, i32) {
    %c0_i32 = arith.constant 0 : i32
    %c0_i32_0 = arith.constant 0 : i32
    %c0_i32_1 = arith.constant 0 : i32
    return %c0_i32, %c0_i32_0 : i32, i32
  }
  func.func @transform_4(%arg0: i32) -> (i32, i32) {
    %c0_i32 = arith.constant 0 : i32
    %c0_i32_0 = arith.constant 0 : i32
    %c0_i32_1 = arith.constant 0 : i32
    return %c0_i32, %c0_i32_0 : i32, i32
  }
  func.func @transform_5(%arg0: i32) -> (i32, i32) {
    %c0_i32 = arith.constant 0 : i32
    %c0_i32_0 = arith.constant 0 : i32
    %c0_i32_1 = arith.constant 0 : i32
    return %c0_i32, %c0_i32_0 : i32, i32
  }
  func.func @transform_6(%arg0: i32) -> (i32, i32) {
    %c0_i32 = arith.constant 0 : i32
    %c0_i32_0 = arith.constant 0 : i32
    %c0_i32_1 = arith.constant 0 : i32
    return %c0_i32, %c0_i32_0 : i32, i32
  }
  func.func @transform_7(%arg0: i32) -> (i32, i32) {
    %c0_i32 = arith.constant 0 : i32
    %c0_i32_0 = arith.constant 0 : i32
    return %arg0, %c0_i32 : i32, i32
  }
}

</mosaic_0001>

<llo_original>
// kernel: robot_self_collision_cost.1
$region0: #{robot_self_collision_cost.1}
  #allocation0 [shape = 'u32[]', space=smem, size = 0x4, offset = 0x4, fixed_abs, tag = 'smem constant byte address 0x4 - core index']
  #allocation1 [shape = 'u32[72,128]{1,0:T(1,128)}', space=vmem, size = 0x9000, scoped, tag = 'internal scratch']
  %s0 = inlined_call_operand.vmem [shape: f32[2], index: 0, kind: input, shape index: {}]
  %s1 = inlined_call_operand.vmem [shape: f32[16,7], index: 1, kind: input, shape index: {}]
  %s2 = inlined_call_operand.vmem [shape: f32[7,128], index: 2, kind: input, shape index: {}]
  %s3 = inlined_call_operand.vmem [shape: f32[1,128], index: 3, kind: input, shape index: {}]
  %s4 = inlined_call_operand.hbm [shape: f32[128,128], index: 4, kind: input, shape index: {}]
  %s5 = inlined_call_operand.vmem [shape: f32[1,128], index: 5, kind: input, shape index: {}]
  %s6 = inlined_call_operand.vmem [shape: f32[1,128], index: 6, kind: input, shape index: {}]
  %s7 = inlined_call_operand.vmem [shape: f32[16,1], index: 7, kind: output, shape index: {}]
  %s8 = sld [smem:[#allocation0]]
  $region46: #{robot_self_collision_cost.1} parent=0
    _
  %s10 = ssub.s32 1, %s8
  %s11 = scalar_select 0, %s10, %s8
  $region1: #{robot_self_collision_cost.1} parent=0
    #allocation2 [shape = 'u8[512]{0}', space=smem, size = 0x200, scoped, tag = 'input window, operand 0, single buffered']
    #allocation3 [shape = 's32[1]{0}', space=sflag, size = 0x4, scoped, tag = 'scoped memory for robot_self_collision_cost.1']
    #allocation4 [shape = 's32[1]{0}', space=sflag, size = 0x4, scoped, tag = 'scoped memory for robot_self_collision_cost.1']
    #allocation5 [shape = 'u8[65536]{0}', space=vmem, size = 0x10000, scoped, tag = 'input window, operand 4, single buffered']
    %12 = vsyncpa [#allocation4], 0
    %13 = vsyncpa [#allocation3], 0
    // Predicated region
    $region2: #{robot_self_collision_cost.1} parent=1 // pred_check
      _
    $region3: #{robot_self_collision_cost.1} parent=1 // pred_check_branch
      %15 = sbr.rel (0) target = $region5
    $region4: #{robot_self_collision_cost.1} parent=1 // pred_region
      %17 = vsyncadd [#allocation4], 0
      %s19 = sshll.u32 %s0, 4
      %s20 = int_to_ptr.vmem [resolvable:$true] %s19
      %22 = dma.vmem_to_smem %s20, 16, [#allocation2], [#allocation4]
    $region5: #{robot_self_collision_cost.1} parent=1 // pred_fallthru
      _
    // Predicated region
    $region6: #{robot_self_collision_cost.1} parent=1 // pred_check
      _
    $region7: #{robot_self_collision_cost.1} parent=1 // pred_check_branch
      %24 = sbr.rel (0) target = $region9
    $region8: #{robot_self_collision_cost.1} parent=1 // pred_region
      _
    $region9: #{robot_self_collision_cost.1} parent=1 // pred_fallthru
      _
    // Predicated region
    $region10: #{robot_self_collision_cost.1} parent=1 // pred_check
      _
    $region11: #{robot_self_collision_cost.1} parent=1 // pred_check_branch
      %26 = sbr.rel (0) target = $region13
    $region12: #{robot_self_collision_cost.1} parent=1 // pred_region
      _
    $region13: #{robot_self_collision_cost.1} parent=1 // pred_fallthru
      _
    // Predicated region
    $region14: #{robot_self_collision_cost.1} parent=1 // pred_check
      _
    $region15: #{robot_self_collision_cost.1} parent=1 // pred_check_branch
      %28 = sbr.rel (0) target = $region17
    $region16: #{robot_self_collision_cost.1} parent=1 // pred_region
      _
    $region17: #{robot_self_collision_cost.1} parent=1 // pred_fallthru
      _
    // Predicated region
    $region18: #{robot_self_collision_cost.1} parent=1 // pred_check
      _
    $region19: #{robot_self_collision_cost.1} parent=1 // pred_check_branch
      %30 = sbr.rel (0) target = $region21
    $region20: #{robot_self_collision_cost.1} parent=1 // pred_region
      %32 = vsyncadd [#allocation3], 0
      %s33 = sshll.u32 %s4, 4
      %s34 = int_to_ptr.hbm [resolvable:$true] %s33
      %s35 = sshll.u32 [#allocation5], 4
      %s36 = int_to_ptr.vmem [resolvable:$true] %s35
      %41 = dma.hbm_to_vmem [thread:$0]  %s34, 2048, %s36, [#allocation3], 128, 128, 8
    $region21: #{robot_self_collision_cost.1} parent=1 // pred_fallthru
      _
    // Predicated region
    $region22: #{robot_self_collision_cost.1} parent=1 // pred_check
      _
    $region23: #{robot_self_collision_cost.1} parent=1 // pred_check_branch
      %43 = sbr.rel (0) target = $region25
    $region24: #{robot_self_collision_cost.1} parent=1 // pred_region
      _
    $region25: #{robot_self_collision_cost.1} parent=1 // pred_fallthru
      _
    // Predicated region
    $region26: #{robot_self_collision_cost.1} parent=1 // pred_check
      _
    $region27: #{robot_self_collision_cost.1} parent=1 // pred_check_branch
      %45 = sbr.rel (0) target = $region29
    $region28: #{robot_self_collision_cost.1} parent=1 // pred_region
      _
    $region29: #{robot_self_collision_cost.1} parent=1 // pred_fallthru
      _
    // Predicated region
    $region30: #{robot_self_collision_cost.1} parent=1 // pred_check
      _
    $region31: #{robot_self_collision_cost.1} parent=1 // pred_check_branch
      %47 = sbr.rel (0) target = $region33
    $region32: #{robot_self_collision_cost.1} parent=1 // pred_region
      %49 = dma.done [#allocation4], 16
    $region33: #{robot_self_collision_cost.1} parent=1 // pred_fallthru
      _
    // Predicated region
    $region34: #{robot_self_collision_cost.1} parent=1 // pred_check
      _
    $region35: #{robot_self_collision_cost.1} parent=1 // pred_check_branch
      %51 = sbr.rel (0) target = $region37
    $region36: #{robot_self_collision_cost.1} parent=1 // pred_region
      %53 = dma.done [#allocation3], 2048
    $region37: #{robot_self_collision_cost.1} parent=1 // pred_fallthru
      _
    %54 = sfence
    %s55 = sld [smem:[#allocation2]]
    %s56 = sld [smem:[#allocation2 + $0x1]]
    %v57 = vld [vmem:[%s1] sm:$0xff]
    %v58 = vld [vmem:[%s1 + $0x8] sm:$0xff]
    %v59 = vld [vmem:[%s2] sm:$0x7f]
    %v60 = vld [vmem:[%s3] sm:$0x1]
    %v62 = vperm.slane %v60, 0
    %vm64 = vcmask 56320
    %v66 = vsel %vm64, %v57, 0
    %v69 = vsel %vm64, %v58, 0
    %vm71 = vcmask 1046528
    %v73 = vsel %vm71, %v59, 0
    %75 = vmatpush.msra.mxu0 0.0
    %76 = vmatpush.msra.mxu0 0.0
    %77 = vmatpush.msra.mxu0 0.0
    %78 = vmatpush.msra.mxu0 0.0
    %79 = vmatpush.msra.mxu0 0.0
    %80 = vmatpush.msra.mxu0 0.0
    %81 = vmatpush.msra.mxu0 0.0
    %82 = vmatpush.msra.mxu0 0.0
    %83 = vmatpush.msra.mxu0 0.0
    %84 = vmatpush.msra.mxu0 0.0
    %85 = vmatpush.msra.mxu0 0.0
    %86 = vmatpush.msra.mxu0 0.0
    %87 = vmatpush.msra.mxu0 0.0
    %88 = vmatpush.msra.mxu0 0.0
    %89 = vmatpush.msra.mxu0 0.0
    %90 = vmatpush.msra.mxu0 %v73
    %91 = vmatmul.f32.gmra.mxu0 %v66
    %v92 = vpop.f32.mrf.mxu0
    %v93 = vadd.f32 %v62, %v92
    %94 = vmatmul.f32.gmra.mxu0 %v69
    %v95 = vpop.f32.mrf.mxu0
    %v96 = vadd.f32 %v62, %v95
    %97 = vdwg.mxu0
    %v98 = vmax.f32 %v93, 0.0
    %v99 = vmax.f32 %v96, 0.0
    %v100 = vld [vmem:[#allocation5] sm:$0xff]
    %v101 = vld [vmem:[#allocation5 + $0x8] sm:$0xff]
    %v102 = vld [vmem:[#allocation5 + $0x10] sm:$0xff]
    %v103 = vld [vmem:[#allocation5 + $0x18] sm:$0xff]
    %v104 = vld [vmem:[#allocation5 + $0x20] sm:$0xff]
    %v105 = vld [vmem:[#allocation5 + $0x28] sm:$0xff]
    %v106 = vld [vmem:[#allocation5 + $0x30] sm:$0xff]
    %v107 = vld [vmem:[#allocation5 + $0x38] sm:$0xff]
    %v108 = vld [vmem:[#allocation5 + $0x40] sm:$0xff]
    %v109 = vld [vmem:[#allocation5 + $0x48] sm:$0xff]
    %v110 = vld [vmem:[#allocation5 + $0x50] sm:$0xff]
    %v111 = vld [vmem:[#allocation5 + $0x58] sm:$0xff]
    %v112 = vld [vmem:[#allocation5 + $0x60] sm:$0xff]
    %v113 = vld [vmem:[#allocation5 + $0x68] sm:$0xff]
    %v114 = vld [vmem:[#allocation5 + $0x70] sm:$0xff]
    %v115 = vld [vmem:[#allocation5 + $0x78] sm:$0xff]
    %v116 = vld [vmem:[%s5] sm:$0x1]
    %v118 = vperm.slane %v116, 0
    %120 = vmatpush.msra.mxu0 %v115
    %121 = vmatpush.msra.mxu0 %v114
    %122 = vmatpush.msra.mxu0 %v113
    %123 = vmatpush.msra.mxu0 %v112
    %124 = vmatpush.msra.mxu0 %v111
    %125 = vmatpush.msra.mxu0 %v110
    %126 = vmatpush.msra.mxu0 %v109
    %127 = vmatpush.msra.mxu0 %v108
    %128 = vmatpush.msra.mxu0 %v107
    %129 = vmatpush.msra.mxu0 %v106
    %130 = vmatpush.msra.mxu0 %v105
    %131 = vmatpush.msra.mxu0 %v104
    %132 = vmatpush.msra.mxu0 %v103
    %133 = vmatpush.msra.mxu0 %v102
    %134 = vmatpush.msra.mxu0 %v101
    %135 = vmatpush.msra.mxu0 %v100
    %136 = vmatmul.f32.gmra.mxu0 %v98
    %v137 = vpop.f32.mrf.mxu0
    %v138 = vadd.f32 %v118, %v137
    %139 = vmatmul.f32.gmra.mxu0 %v99
    %v140 = vpop.f32.mrf.mxu0
    %v141 = vadd.f32 %v118, %v140
    %142 = vdwg.mxu0
    %v143 = vmax.f32 %v138, 0.0
    %v144 = vmax.f32 %v141, 0.0
    %v145 = vld [vmem:[%s6] sm:$0x1]
    %v147 = vperm.slane %v145, 0
    %v149 = vmul.f32 %v143, %v147
    %v150 = vmul.f32 %v144, %v147
    %151 = vadd.xlane.f32.xlu0 %v149
    %v152 = vpop.xlane.xlu0 %151
    %153 = vadd.xlane.f32.xlu0 %v150
    %v154 = vpop.xlane.xlu0 %153
    %v155 = vstv %s55
    %v156 = vadd.f32 %v152, %v155
    %v157 = vadd.f32 %v154, %v155
    %v158 = vmax.f32 %v156, 0.0
    %v159 = vmax.f32 %v157, 0.0
    %v160 = vstv %s56
    %v161 = vmin.f32 %v160, %v158
    %v162 = vmin.f32 %v160, %v159
    %vm163 = vcmask 7168
    %164 = vst.msk [vmem:[%s7] sm:$0xff] %vm163, %v161
    %165 = vst.msk [vmem:[%s7 + $0x8] sm:$0xff] %vm163, %v162
    // Predicated region
    $region38: #{robot_self_collision_cost.1} parent=1 // pred_check
      _
    $region39: #{robot_self_collision_cost.1} parent=1 // pred_check_branch
      %167 = sbr.rel (0) target = $region41
    $region40: #{robot_self_collision_cost.1} parent=1 // pred_region
      _
    $region41: #{robot_self_collision_cost.1} parent=1 // pred_fallthru
      _
    // Predicated region
    $region42: #{robot_self_collision_cost.1} parent=1 // pred_check
      _
    $region43: #{robot_self_collision_cost.1} parent=1 // pred_check_branch
      %169 = sbr.rel (0) target = $region45
    $region44: #{robot_self_collision_cost.1} parent=1 // pred_region
      _
    $region45: #{robot_self_collision_cost.1} parent=1 // pred_fallthru
      _
    %170 = vsyncpa [#allocation3], 1
    %171 = vsyncpa [#allocation4], 1

</llo_original>
